<compile_context>
chip_gen: v5e
topology: v5e:2x2
jax: 0.10.0
libtpu: 0.0.40
codegen_flags: <defaults>
</compile_context>

<pallas_src>
import jax
import jax.numpy as jnp
from jax.experimental import pallas as pl
from jax.experimental.pallas import tpu as pltpu


def _round_up(x, m):
    return (x + m - 1) // m * m


def _cdiv(a, b):
    return (a + b - 1) // b


def critic_mlp_kernel(x_ref, w1_ref, b1_ref, w2_ref, b2_ref, w3_ref, b3_ref, q_ref):
    # Layer 1: one bf16 MXU matmul over the merged [obs | act] input, f32 accumulate.
    h1 = jnp.dot(x_ref[...], w1_ref[...], preferred_element_type=jnp.float32)
    h1 = jnp.maximum(h1 + b1_ref[...], 0.0)

    # Layer 2: bf16 MXU matmul, f32 accumulate, bias + ReLU in f32.
    h2 = jnp.dot(h1.astype(jnp.bfloat16), w2_ref[...],
                 preferred_element_type=jnp.float32)
    h2 = jnp.maximum(h2 + b2_ref[...], 0.0)

    # Layer 3 (out_dim == 1): VPU multiply + lane reduction instead of an N=1 MXU
    # matmul. Written lane-dense as a (1, TB) row (batch along lanes).
    q = jnp.sum(h2 * w3_ref[...], axis=-1)                       # (TB,)
    q_ref[...] = (q[None, :] + b3_ref[...]).astype(q_ref.dtype)  # (1, TB)


def critic_forward(obs, act, params, *, max_batch_tile=2048):
    """Pallas implementation of Critic.forward(obs, act) -> (B, 1)."""
    w1, b1, w2, b2, w3, b3 = params
    B = obs.shape[0]
    in_dim = obs.shape[1] + act.shape[1]
    h1p, h2p = w2.shape  # lane-padded hidden dims
    assert w1.shape == (in_dim, h1p)

    # The cat([obs, act]) is required for the single merged layer-1 matmul; the
    # bf16 convert fuses into the same XLA op, so this is the only wrapper-side
    # pass over the batch (no zero-pad, no separate cast).
    x = jnp.concatenate([obs, act], axis=-1).astype(jnp.bfloat16)

    # Batch tiling: tiny batches run as one full-size block (block == array dims);
    # otherwise lane-aligned tiles with >= 2 grid steps, capped by max_batch_tile.
    if B <= 128:
        TB = B
    else:
        TB = min(max_batch_tile, _round_up(_cdiv(B, 2), 128))
    num_tiles = _cdiv(B, TB)  # last tile may be ragged; Pallas pads the boundary block

    def resident(p):
        # Same block index every grid step -> parameter stays resident in VMEM.
        return pl.BlockSpec(p.shape, lambda i: (0, 0))

    flops = int(2 * B * (in_dim * h1p + h1p * h2p + h2p))
    param_bytes = sum(int(p.size) * p.dtype.itemsize for p in params)
    bytes_accessed = int(x.size * 2 + param_bytes + num_tiles * TB * 4)

    grid_spec = pltpu.PrefetchScalarGridSpec(
        num_scalar_prefetch=0,
        grid=(num_tiles,),
        in_specs=[
            pl.BlockSpec((TB, in_dim), lambda i: (i, 0)),
            resident(w1), resident(b1),
            resident(w2), resident(b2),
            resident(w3), resident(b3),
        ],
        out_specs=pl.BlockSpec((1, TB), lambda i: (i, 0)),
    )

    q_slab = pl.pallas_call(
        critic_mlp_kernel,
        out_shape=jax.ShapeDtypeStruct((num_tiles, TB), jnp.float32),
        grid_spec=grid_spec,
        compiler_params=pltpu.CompilerParams(
            dimension_semantics=("parallel",),         # megacore sharding on v7x
            vmem_limit_bytes=32 * 1024 * 1024),        # headroom for TB up to 2048
        cost_estimate=pl.CostEstimate(
            flops=flops, transcendentals=0, bytes_accessed=bytes_accessed),
    )(x, w1, b1, w2, b2, w3, b3)

    # Lane-dense (num_tiles, TB) slab -> (B, 1); garbage tail rows are sliced off.
    return q_slab.reshape(-1)[:B][:, None]


def init_critic_params(key, obs_dim, action_dim, hidden_dims=(400, 300)):
    """PyTorch-style default init (U(-1/sqrt(fan_in), 1/sqrt(fan_in))), stored TPU-friendly.

    Returns (w1, b1, w2, b2, w3_row, b3):
      * w1 is the merged (obs_dim+action_dim, H1p) first-layer weight (single matmul),
      * hidden dims zero-padded to multiples of 128 (padded rows/cols/bias lanes are 0),
      * matmul weights in bf16; biases and the final (1, H2p) row in f32.
    """
    h1, h2 = hidden_dims
    h1p, h2p = _round_up(h1, 128), _round_up(h2, 128)
    in_dim = obs_dim + action_dim
    key, k1w, k1b, k2w, k2b, k3w, k3b = jax.random.split(key, 7)

    def uniform(k, shape, fan_in):
        bound = 1.0 / float(fan_in) ** 0.5
        return jax.random.uniform(k, shape, jnp.float32, -bound, bound)

    # Layer 1 (merged obs+act input)
    w1 = uniform(k1w, (in_dim, h1), in_dim)
    b1 = uniform(k1b, (1, h1), in_dim)
    w1p = jnp.zeros((in_dim, h1p), jnp.float32).at[:, :h1].set(w1)
    b1p = jnp.zeros((1, h1p), jnp.float32).at[:, :h1].set(b1)

    # Layer 2
    w2 = uniform(k2w, (h1, h2), h1)
    b2 = uniform(k2b, (1, h2), h1)
    w2p = jnp.zeros((h1p, h2p), jnp.float32).at[:h1, :h2].set(w2)
    b2p = jnp.zeros((1, h2p), jnp.float32).at[:, :h2].set(b2)

    # Layer 3 (stored as a row; kernel uses a VPU multiply-reduce, not the MXU)
    w3 = uniform(k3w, (h2, 1), h2)
    b3 = uniform(k3b, (1, 1), h2)
    w3p = jnp.zeros((1, h2p), jnp.float32).at[:, :h2].set(w3.T)

    return (w1p.astype(jnp.bfloat16), b1p,
            w2p.astype(jnp.bfloat16), b2p, w3p, b3)


def critic_reference(obs, act, params):
    """Pure-JAX fp32 reference (same bf16-rounded weights, fp32 activations/matmuls)."""
    w1, b1, w2, b2, w3, b3 = params
    x = jnp.concatenate([obs, act], axis=-1).astype(jnp.float32)
    h1 = jnp.maximum(x @ w1.astype(jnp.float32) + b1, 0.0)
    h2 = jnp.maximum(h1 @ w2.astype(jnp.float32) + b2, 0.0)
    return jnp.sum(h2 * w3, axis=-1, keepdims=True) + b3


if __name__ == "__main__":
    # Small, module-consistent shapes: batch=2, obs_dim=16, action_dim=4, hidden=(400, 300).
    B, OBS_DIM, ACT_DIM = 2, 16, 4
    key = jax.random.PRNGKey(0)
    k_obs, k_act, k_params = jax.random.split(key, 3)

    obs = jax.random.normal(k_obs, (B, OBS_DIM), jnp.float32)
    act = jax.random.normal(k_act, (B, ACT_DIM), jnp.float32)
    params = init_critic_params(k_params, OBS_DIM, ACT_DIM, hidden_dims=(400, 300))

    q = jax.block_until_ready(critic_forward(obs, act, params))
    q_ref = critic_reference(obs, act, params)
    assert q.shape == (B, 1), q.shape
    # bf16 matmuls with f32 accumulation: allow ~1e-2-level deviation from the fp32 reference.
    assert jnp.allclose(q, q_ref, atol=5e-2, rtol=5e-2), (q, q_ref)

    # Also exercise the multi-tile / ragged-batch path (2 grid steps, boundary-padded tile).
    B2 = 300
    k_o2, k_a2 = jax.random.split(jax.random.PRNGKey(1), 2)
    obs2 = jax.random.normal(k_o2, (B2, OBS_DIM), jnp.float32)
    act2 = jax.random.normal(k_a2, (B2, ACT_DIM), jnp.float32)
    q2 = jax.block_until_ready(critic_forward(obs2, act2, params))
    q2_ref = critic_reference(obs2, act2, params)
    assert q2.shape == (B2, 1), q2.shape
    assert jnp.allclose(q2, q2_ref, atol=5e-2, rtol=5e-2)

    print("KERNEL_OK")
</pallas_src>

<mosaic_0001>
module attributes {stable_mosaic.version = 11 : i64} {
  func.func @critic_mlp_kernel(%arg0: i32, %arg1: memref<2x20xbf16, #tpu.memory_space<vmem>>, %arg2: memref<20x512xbf16, #tpu.memory_space<vmem>>, %arg3: memref<1x512xf32, #tpu.memory_space<vmem>>, %arg4: memref<512x384xbf16, #tpu.memory_space<vmem>>, %arg5: memref<1x384xf32, #tpu.memory_space<vmem>>, %arg6: memref<1x384xf32, #tpu.memory_space<vmem>>, %arg7: memref<1x1xf32, #tpu.memory_space<vmem>>, %arg8: memref<1x2xf32, #tpu.memory_space<vmem>>) attributes {dimension_semantics = [#tpu.dimension_semantics<parallel>], iteration_bounds = array<i64: 1>, scalar_prefetch = 0 : i64, scratch_operands = 0 : i64, tpu.core_type = #tpu.core_type<tc>, window_params = [{transform_indices = @transform_0, window_bounds = array<i64: 2, 20>}, {pipeline_mode = #tpu.pipeline_mode<synchronous>, transform_indices = @transform_1, window_bounds = array<i64: 20, 512>}, {pipeline_mode = #tpu.pipeline_mode<synchronous>, transform_indices = @transform_2, window_bounds = array<i64: 1, 512>}, {pipeline_mode = #tpu.pipeline_mode<synchronous>, transform_indices = @transform_3, window_bounds = array<i64: 512, 384>}, {pipeline_mode = #tpu.pipeline_mode<synchronous>, transform_indices = @transform_4, window_bounds = array<i64: 1, 384>}, {pipeline_mode = #tpu.pipeline_mode<synchronous>, transform_indices = @transform_5, window_bounds = array<i64: 1, 384>}, {pipeline_mode = #tpu.pipeline_mode<synchronous>, transform_indices = @transform_6, window_bounds = array<i64: 1, 1>}, {transform_indices = @transform_7, window_bounds = array<i64: 1, 2>}]} {
    %c0 = arith.constant 0 : index
    %c0_0 = arith.constant 0 : index
    %0 = vector.load %arg1[%c0, %c0_0] : memref<2x20xbf16, #tpu.memory_space<vmem>>, vector<2x20xbf16>
    %c0_1 = arith.constant 0 : index
    %c0_2 = arith.constant 0 : index
    %1 = vector.load %arg2[%c0_1, %c0_2] : memref<20x512xbf16, #tpu.memory_space<vmem>>, vector<20x512xbf16>
    %cst = arith.constant dense<0.000000e+00> : vector<2x512xf32>
    %2 = tpu.matmul %0, %1, %cst {dimension_numbers = #tpu.dot_dimension_numbers<[1], [0], [0], [1], [0, 0, 1, 1], [], []>} : vector<2x20xbf16>, vector<20x512xbf16>, vector<2x512xf32> -> vector<2x512xf32>
    %c0_3 = arith.constant 0 : index
    %c0_4 = arith.constant 0 : index
    %3 = vector.load %arg3[%c0_3, %c0_4] : memref<1x512xf32, #tpu.memory_space<vmem>>, vector<1x512xf32>
    %4 = vector.broadcast %3 : vector<1x512xf32> to vector<2x512xf32>
    %5 = arith.addf %2, %4 : vector<2x512xf32>
    %cst_5 = arith.constant 0.000000e+00 : f32
    %6 = vector.broadcast %cst_5 : f32 to vector<2x512xf32>
    %7 = arith.maximumf %5, %6 : vector<2x512xf32>
    %8 = arith.truncf %7 : vector<2x512xf32> to vector<2x512xbf16>
    %c0_6 = arith.constant 0 : index
    %c0_7 = arith.constant 0 : index
    %9 = vector.load %arg4[%c0_6, %c0_7] : memref<512x384xbf16, #tpu.memory_space<vmem>>, vector<512x384xbf16>
    %cst_8 = arith.constant dense<0.000000e+00> : vector<2x384xf32>
    %10 = tpu.matmul %8, %9, %cst_8 {dimension_numbers = #tpu.dot_dimension_numbers<[1], [0], [0], [1], [0, 0, 1, 1], [], []>} : vector<2x512xbf16>, vector<512x384xbf16>, vector<2x384xf32> -> vector<2x384xf32>
    %c0_9 = arith.constant 0 : index
    %c0_10 = arith.constant 0 : index
    %11 = vector.load %arg5[%c0_9, %c0_10] : memref<1x384xf32, #tpu.memory_space<vmem>>, vector<1x384xf32>
    %12 = vector.broadcast %11 : vector<1x384xf32> to vector<2x384xf32>
    %13 = arith.addf %10, %12 : vector<2x384xf32>
    %cst_11 = arith.constant 0.000000e+00 : f32
    %14 = vector.broadcast %cst_11 : f32 to vector<2x384xf32>
    %15 = arith.maximumf %13, %14 : vector<2x384xf32>
    %c0_12 = arith.constant 0 : index
    %c0_13 = arith.constant 0 : index
    %16 = vector.load %arg6[%c0_12, %c0_13] : memref<1x384xf32, #tpu.memory_space<vmem>>, vector<1x384xf32>
    %17 = vector.broadcast %16 : vector<1x384xf32> to vector<2x384xf32>
    %18 = arith.mulf %15, %17 : vector<2x384xf32>
    %cst_14 = arith.constant dense<0.000000e+00> : vector<2xf32>
    %19 = vector.multi_reduction <add>, %18, %cst_14 [1] : vector<2x384xf32> to vector<2xf32>
    %20 = vector.shape_cast %19 : vector<2xf32> to vector<1x2xf32>
    %c0_15 = arith.constant 0 : index
    %c0_16 = arith.constant 0 : index
    %21 = vector.load %arg7[%c0_15, %c0_16] : memref<1x1xf32, #tpu.memory_space<vmem>>, vector<1x1xf32>
    %22 = vector.broadcast %21 : vector<1x1xf32> to vector<1x2xf32>
    %23 = arith.addf %20, %22 : vector<1x2xf32>
    %c0_17 = arith.constant 0 : index
    %c0_18 = arith.constant 0 : index
    %24 = vector.load %arg8[%c0_17, %c0_18] : memref<1x2xf32, #tpu.memory_space<vmem>>, vector<1x2xf32>
    tpu.vector_store %arg8[%c0_17, %c0_18], %23 {strides = array<i32>} : memref<1x2xf32, #tpu.memory_space<vmem>>, vector<1x2xf32>,
    return
  }
  func.func @transform_0(%arg0: i32) -> (i32, i32) {
    %c0_i32 = arith.constant 0 : i32
    %c0_i32_0 = arith.constant 0 : i32
    return %arg0, %c0_i32 : i32, i32
  }
  func.func @transform_1(%arg0: i32) -> (i32, i32) {
    %c0_i32 = arith.constant 0 : i32
    %c0_i32_0 = arith.constant 0 : i32
    %c0_i32_1 = arith.constant 0 : i32
    return %c0_i32, %c0_i32_0 : i32, i32
  }
  func.func @transform_2(%arg0: i32) -> (i32, i32) {
    %c0_i32 = arith.constant 0 : i32
    %c0_i32_0 = arith.constant 0 : i32
    %c0_i32_1 = arith.constant 0 : i32
    return %c0_i32, %c0_i32_0 : i32, i32
  }
  func.func @transform_3(%arg0: i32) -> (i32, i32) {
    %c0_i32 = arith.constant 0 : i32
    %c0_i32_0 = arith.constant 0 : i32
    %c0_i32_1 = arith.constant 0 : i32
    return %c0_i32, %c0_i32_0 : i32, i32
  }
  func.func @transform_4(%arg0: i32) -> (i32, i32) {
    %c0_i32 = arith.constant 0 : i32
    %c0_i32_0 = arith.constant 0 : i32
    %c0_i32_1 = arith.constant 0 : i32
    return %c0_i32, %c0_i32_0 : i32, i32
  }
  func.func @transform_5(%arg0: i32) -> (i32, i32) {
    %c0_i32 = arith.constant 0 : i32
    %c0_i32_0 = arith.constant 0 : i32
    %c0_i32_1 = arith.constant 0 : i32
    return %c0_i32, %c0_i32_0 : i32, i32
  }
  func.func @transform_6(%arg0: i32) -> (i32, i32) {
    %c0_i32 = arith.constant 0 : i32
    %c0_i32_0 = arith.constant 0 : i32
    %c0_i32_1 = arith.constant 0 : i32
    return %c0_i32, %c0_i32_0 : i32, i32
  }
  func.func @transform_7(%arg0: i32) -> (i32, i32) {
    %c0_i32 = arith.constant 0 : i32
    %c0_i32_0 = arith.constant 0 : i32
    return %arg0, %c0_i32 : i32, i32
  }
}

</mosaic_0001>

<llo_original>
// kernel: tpu_custom_call.1
$region0: #{tpu_custom_call.1}
  #allocation0 [shape = 'u32[]', space=smem, size = 0x4, offset = 0x4, fixed_abs, tag = 'smem constant byte address 0x4 - core index']
  #allocation1 [shape = 'u32[72,128]{1,0:T(1,128)}', space=vmem, size = 0x9000, scoped, tag = 'internal scratch']
  #allocation2 [shape = 'f32[1,1]{1,0:T(1,128)S(1)}', space=vmem, size = 0x200, scoped, tag = 'scoped memory for tpu_custom_call.1']
  %s0 = inlined_call_operand.hbm [shape: bf16[2,20], index: 0, kind: input, shape index: {}]
  %s1 = inlined_call_operand.hbm [shape: bf16[20,512], index: 1, kind: input, shape index: {}]
  %s2 = inlined_call_operand.hbm [shape: f32[1,512], index: 2, kind: input, shape index: {}]
  %s3 = inlined_call_operand.hbm [shape: bf16[512,384], index: 3, kind: input, shape index: {}]
  %s4 = inlined_call_operand.vmem [shape: f32[1,384], index: 4, kind: input, shape index: {}]
  %s5 = inlined_call_operand.vmem [shape: f32[1,384], index: 5, kind: input, shape index: {}]
  %s6 = inlined_call_operand.<no memory space> [shape: f32[1,1], index: 6, kind: input, shape index: {}]
  %s7 = inlined_call_operand.hbm [shape: f32[1,2], index: 7, kind: output, shape index: {}]
  %s8 = sld [smem:[#allocation0]]
  $region54: #{tpu_custom_call.1} parent=0
    _
  %s10 = ssub.s32 1, %s8
  %s11 = scalar_select 0, %s10, %s8
  %v12 = vstv %s6
  %13 = vst [vmem:[#allocation2] sm:$0x1] %v12
  $region1: #{tpu_custom_call.1} parent=0
    #allocation3 [shape = 'u8[512]{0}', space=vmem, size = 0x400, scoped, tag = 'input window, operand 0, single buffered']
    #allocation4 [shape = 's32[1]{0}', space=sflag, size = 0x4, scoped, tag = 'scoped memory for tpu_custom_call.1']
    #allocation5 [shape = 's32[1]{0}', space=sflag, size = 0x4, scoped, tag = 'scoped memory for tpu_custom_call.1']
    #allocation6 [shape = 'u8[24576]{0}', space=vmem, size = 0x6000, scoped, tag = 'input window, operand 1, single buffered']
    #allocation7 [shape = 's32[1]{0}', space=sflag, size = 0x4, scoped, tag = 'scoped memory for tpu_custom_call.1']
    #allocation8 [shape = 'u8[2048]{0}', space=vmem, size = 0x800, scoped, tag = 'input window, operand 2, single buffered']
    #allocation9 [shape = 'u8[393216]{0}', space=vmem, size = 0x60000, scoped, tag = 'input window, operand 3, single buffered']
    #allocation10 [shape = 's32[1]{0}', space=sflag, size = 0x4, scoped, tag = 'scoped memory for tpu_custom_call.1']
    #allocation11 [shape = 'u8[512]{0}', space=vmem, size = 0x400, scoped, tag = 'output window, operand 0, single buffered']
    %14 = vsyncpa [#allocation4], 0
    %15 = vsyncpa [#allocation7], 0
    %16 = vsyncpa [#allocation10], 0
    %17 = vsyncpa [#allocation5], 0
    // Predicated region
    $region2: #{tpu_custom_call.1} parent=1 // pred_check
      _
    $region3: #{tpu_custom_call.1} parent=1 // pred_check_branch
      %19 = sbr.rel (0) target = $region5
    $region4: #{tpu_custom_call.1} parent=1 // pred_region
      %21 = vsyncadd [#allocation4], 0
      %s23 = sshll.u32 %s0, 4
      %s24 = int_to_ptr.hbm [resolvable:$true] %s23
      %s25 = sshll.u32 [#allocation3], 4
      %s26 = int_to_ptr.vmem [resolvable:$true] %s25
      %28 = dma.hbm_to_vmem [thread:$0]  %s24, 16, %s26, [#allocation4]
    $region5: #{tpu_custom_call.1} parent=1 // pred_fallthru
      _
    // Predicated region
    $region6: #{tpu_custom_call.1} parent=1 // pred_check
      _
    $region7: #{tpu_custom_call.1} parent=1 // pred_check_branch
      %30 = sbr.rel (0) target = $region9
    $region8: #{tpu_custom_call.1} parent=1 // pred_region
      %32 = vsyncadd [#allocation7], 0
      %s33 = sshll.u32 %s1, 4
      %s34 = int_to_ptr.hbm [resolvable:$true] %s33
      %s35 = sshll.u32 [#allocation6], 4
      %s36 = int_to_ptr.vmem [resolvable:$true] %s35
      %41 = dma.hbm_to_vmem [thread:$0]  %s34, 768, %s36, [#allocation7], 256, 256, 16
    $region9: #{tpu_custom_call.1} parent=1 // pred_fallthru
      _
    // Predicated region
    $region10: #{tpu_custom_call.1} parent=1 // pred_check
      _
    $region11: #{tpu_custom_call.1} parent=1 // pred_check_branch
      %43 = sbr.rel (0) target = $region13
    $region12: #{tpu_custom_call.1} parent=1 // pred_region
      %45 = vsyncadd [#allocation7], 0
      %s47 = sshll.u32 %s2, 4
      %s48 = int_to_ptr.hbm [resolvable:$true] %s47
      %s49 = sshll.u32 [#allocation8], 4
      %s50 = int_to_ptr.vmem [resolvable:$true] %s49
      %52 = dma.hbm_to_vmem [thread:$0]  %s48, 64, %s50, [#allocation7]
    $region13: #{tpu_custom_call.1} parent=1 // pred_fallthru
      _
    // Predicated region
    $region14: #{tpu_custom_call.1} parent=1 // pred_check
      _
    $region15: #{tpu_custom_call.1} parent=1 // pred_check_branch
      %54 = sbr.rel (0) target = $region17
    $region16: #{tpu_custom_call.1} parent=1 // pred_region
      %56 = vsyncadd [#allocation10], 0
      %s57 = sshll.u32 %s3, 4
      %s58 = int_to_ptr.hbm [resolvable:$true] %s57
      %s59 = sshll.u32 [#allocation9], 4
      %s60 = int_to_ptr.vmem [resolvable:$true] %s59
      %65 = dma.hbm_to_vmem [thread:$0]  %s58, 12288, %s60, [#allocation10], 192, 192, 12
    $region17: #{tpu_custom_call.1} parent=1 // pred_fallthru
      _
    // Predicated region
    $region18: #{tpu_custom_call.1} parent=1 // pred_check
      _
    $region19: #{tpu_custom_call.1} parent=1 // pred_check_branch
      %67 = sbr.rel (0) target = $region21
    $region20: #{tpu_custom_call.1} parent=1 // pred_region
      _
    $region21: #{tpu_custom_call.1} parent=1 // pred_fallthru
      _
    // Predicated region
    $region22: #{tpu_custom_call.1} parent=1 // pred_check
      _
    $region23: #{tpu_custom_call.1} parent=1 // pred_check_branch
      %69 = sbr.rel (0) target = $region25
    $region24: #{tpu_custom_call.1} parent=1 // pred_region
      _
    $region25: #{tpu_custom_call.1} parent=1 // pred_fallthru
      _
    // Predicated region
    $region26: #{tpu_custom_call.1} parent=1 // pred_check
      _
    $region27: #{tpu_custom_call.1} parent=1 // pred_check_branch
      %71 = sbr.rel (0) target = $region29
    $region28: #{tpu_custom_call.1} parent=1 // pred_region
      _
    $region29: #{tpu_custom_call.1} parent=1 // pred_fallthru
      _
    // Predicated region
    $region30: #{tpu_custom_call.1} parent=1 // pred_check
      _
    $region31: #{tpu_custom_call.1} parent=1 // pred_check_branch
      %73 = sbr.rel (0) target = $region33
    $region32: #{tpu_custom_call.1} parent=1 // pred_region
      %75 = dma.done [#allocation4], 16
    $region33: #{tpu_custom_call.1} parent=1 // pred_fallthru
      _
    // Predicated region
    $region34: #{tpu_custom_call.1} parent=1 // pred_check
      _
    $region35: #{tpu_custom_call.1} parent=1 // pred_check_branch
      %77 = sbr.rel (0) target = $region37
    $region36: #{tpu_custom_call.1} parent=1 // pred_region
      %79 = dma.done [#allocation7], 768
    $region37: #{tpu_custom_call.1} parent=1 // pred_fallthru
      _
    // Predicated region
    $region38: #{tpu_custom_call.1} parent=1 // pred_check
      _
    $region39: #{tpu_custom_call.1} parent=1 // pred_check_branch
      %81 = sbr.rel (0) target = $region41
    $region40: #{tpu_custom_call.1} parent=1 // pred_region
      %83 = dma.done [#allocation7], 64
    $region41: #{tpu_custom_call.1} parent=1 // pred_fallthru
      _
    // Predicated region
    $region42: #{tpu_custom_call.1} parent=1 // pred_check
      _
    $region43: #{tpu_custom_call.1} parent=1 // pred_check_branch
      %85 = sbr.rel (0) target = $region45
    $region44: #{tpu_custom_call.1} parent=1 // pred_region
      %87 = dma.done [#allocation10], 12288
    $region45: #{tpu_custom_call.1} parent=1 // pred_fallthru
      _
    %v89 = vld [vmem:[#allocation3] sm:$0x1]
    %v90 = vld [vmem:[#allocation6] sm:$0xff]
    %v91 = vld [vmem:[#allocation6 + $0x8] sm:$0xff]
    %v92 = vld [vmem:[#allocation6 + $0x10] sm:$0xff]
    %v93 = vld [vmem:[#allocation6 + $0x18] sm:$0xff]
    %v94 = vld [vmem:[#allocation6 + $0x20] sm:$0x33]
    %v95 = vld [vmem:[#allocation6 + $0x28] sm:$0x33]
    %v96 = vld [vmem:[#allocation8] sm:$0xf]
    %v98 = vperm.slane %v96, 0
    %v99 = vperm.slane %v96, 1
    %v100 = vperm.slane %v96, 2
    %v101 = vperm.slane %v96, 3
    %v112 = vunpack.c.l.b16 %v90
    %v113 = vunpack.c.h.b16 %v90
    %v114 = vunpack.c.l.b16 %v91
    %v115 = vunpack.c.h.b16 %v91
    %v116 = vunpack.c.l.b16 %v92
    %v117 = vunpack.c.h.b16 %v92
    %v118 = vunpack.c.l.b16 %v93
    %v119 = vunpack.c.h.b16 %v93
    %v120 = vunpack.c.l.b16 %v94
    %v121 = vunpack.c.h.b16 %v94
    %v122 = vunpack.c.l.b16 %v95
    %v123 = vunpack.c.h.b16 %v95
    %v124 = vpack.c.b16 %v116, %v112
    %v125 = vpack.c.b16 %v117, %v113
    %v126 = vpack.c.b16 %v118, %v114
    %v127 = vpack.c.b16 %v119, %v115
    %v128 = vpack.c.b16 %v120, %v120
    %v129 = vpack.c.b16 %v121, %v121
    %v130 = vpack.c.b16 %v122, %v122
    %v131 = vpack.c.b16 %v123, %v123
    %vm136 = vcmask 162816
    %v138 = vsel %vm136, %v89, 0
    %vm140 = vcmask 1041408
    %v142 = vsel %vm140, %v128, 0
    %v145 = vsel %vm140, %v129, 0
    %v148 = vsel %vm140, %v130, 0
    %v151 = vsel %vm140, %v131, 0
    %153 = vmatpush.bf16.msra.mxu0 0
    %154 = vmatpush.bf16.msra.mxu0 0
    %155 = vmatpush.bf16.msra.mxu0 0
    %156 = vmatpush.bf16.msra.mxu0 0
    %157 = vmatpush.bf16.msra.mxu0 0
    %158 = vmatpush.bf16.msra.mxu0 0
    %159 = vmatpush.bf16.msra.mxu0 %v142
    %160 = vmatpush.bf16.msra.mxu0 %v124
    %161 = vmatmul.bf16.gmra.mxu0 %v138
    %v162 = vpop.f32.mrf.mxu0
    %v163 = vadd.f32 %v98, %v162
    %v164 = vpop.f32.mrf.mxu0
    %165 = vdwg.mxu0
    %166 = vmatpush.bf16.msra.mxu0 0
    %167 = vmatpush.bf16.msra.mxu0 0
    %168 = vmatpush.bf16.msra.mxu0 0
    %169 = vmatpush.bf16.msra.mxu0 0
    %170 = vmatpush.bf16.msra.mxu0 0
    %171 = vmatpush.bf16.msra.mxu0 0
    %172 = vmatpush.bf16.msra.mxu0 %v145
    %173 = vmatpush.bf16.msra.mxu0 %v125
    %174 = vmatmul.bf16.gmra.mxu0 %v138
    %v175 = vpop.f32.mrf.mxu0
    %v176 = vadd.f32 %v99, %v175
    %v177 = vpop.f32.mrf.mxu0
    %178 = vdwg.mxu0
    %179 = vmatpush.bf16.msra.mxu0 0
    %180 = vmatpush.bf16.msra.mxu0 0
    %181 = vmatpush.bf16.msra.mxu0 0
    %182 = vmatpush.bf16.msra.mxu0 0
    %183 = vmatpush.bf16.msra.mxu0 0
    %184 = vmatpush.bf16.msra.mxu0 0
    %185 = vmatpush.bf16.msra.mxu0 %v148
    %186 = vmatpush.bf16.msra.mxu0 %v126
    %187 = vmatmul.bf16.gmra.mxu0 %v138
    %v188 = vpop.f32.mrf.mxu0
    %v189 = vadd.f32 %v100, %v188
    %v190 = vpop.f32.mrf.mxu0
    %191 = vdwg.mxu0
    %192 = vmatpush.bf16.msra.mxu0 0
    %193 = vmatpush.bf16.msra.mxu0 0
    %194 = vmatpush.bf16.msra.mxu0 0
    %195 = vmatpush.bf16.msra.mxu0 0
    %196 = vmatpush.bf16.msra.mxu0 0
    %197 = vmatpush.bf16.msra.mxu0 0
    %198 = vmatpush.bf16.msra.mxu0 %v151
    %199 = vmatpush.bf16.msra.mxu0 %v127
    %200 = vmatmul.bf16.gmra.mxu0 %v138
    %v201 = vpop.f32.mrf.mxu0
    %v202 = vadd.f32 %v101, %v201
    %v203 = vpop.f32.mrf.mxu0
    %204 = vdwg.mxu0
    %v205 = vmax.f32 %v163, 0.0
    %v206 = vmax.f32 %v176, 0.0
    %v207 = vmax.f32 %v189, 0.0
    %v208 = vmax.f32 %v202, 0.0
    %v209 = vpack.c.bf16 %v205, %v205
    %v210 = vpack.c.bf16 %v206, %v206
    %v211 = vpack.c.bf16 %v207, %v207
    %v212 = vpack.c.bf16 %v208, %v208
    %v213 = vld [vmem:[#allocation9] sm:$0xff]
    %v214 = vld [vmem:[#allocation9 + $0x8] sm:$0xf]
    %v215 = vld [vmem:[#allocation9 + $0xc] sm:$0xff]
    %v216 = vld [vmem:[#allocation9 + $0x14] sm:$0xf]
    %v217 = vld [vmem:[#allocation9 + $0x18] sm:$0xff]
    %v218 = vld [vmem:[#allocation9 + $0x20] sm:$0xf]
    %v219 = vld [vmem:[#allocation9 + $0x24] sm:$0xff]
    %v220 = vld [vmem:[#allocation9 + $0x2c] sm:$0xf]
    %v221 = vld [vmem:[#allocation9 + $0x30] sm:$0xff]
    %v222 = vld [vmem:[#allocation9 + $0x38] sm:$0xf]
    %v223 = vld [vmem:[#allocation9 + $0x3c] sm:$0xff]
    %v224 = vld [vmem:[#allocation9 + $0x44] sm:$0xf]
    %v225 = vld [vmem:[#allocation9 + $0x48] sm:$0xff]
    %v226 = vld [vmem:[#allocation9 + $0x50] sm:$0xf]
    %v227 = vld [vmem:[#allocation9 + $0x54] sm:$0xff]
    %v228 = vld [vmem:[#allocation9 + $0x5c] sm:$0xf]
    %v229 = vld [vmem:[#allocation9 + $0x60] sm:$0xff]
    %v230 = vld [vmem:[#allocation9 + $0x68] sm:$0xf]
    %v231 = vld [vmem:[#allocation9 + $0x6c] sm:$0xff]
    %v232 = vld [vmem:[#allocation9 + $0x74] sm:$0xf]
    %v233 = vld [vmem:[#allocation9 + $0x78] sm:$0xff]
    %v234 = vld [vmem:[#allocation9 + $0x80] sm:$0xf]
    %v235 = vld [vmem:[#allocation9 + $0x84] sm:$0xff]
    %v236 = vld [vmem:[#allocation9 + $0x8c] sm:$0xf]
    %v237 = vld [vmem:[#allocation9 + $0x90] sm:$0xff]
    %v238 = vld [vmem:[#allocation9 + $0x98] sm:$0xf]
    %v239 = vld [vmem:[#allocation9 + $0x9c] sm:$0xff]
    %v240 = vld [vmem:[#allocation9 + $0xa4] sm:$0xf]
    %v241 = vld [vmem:[#allocation9 + $0xa8] sm:$0xff]
    %v242 = vld [vmem:[#allocation9 + $0xb0] sm:$0xf]
    %v243 = vld [vmem:[#allocation9 + $0xb4] sm:$0xff]
    %v244 = vld [vmem:[#allocation9 + $0xbc] sm:$0xf]
    %v245 = vld [vmem:[#allocation9 + $0xc0] sm:$0xff]
    %v246 = vld [vmem:[#allocation9 + $0xc8] sm:$0xf]
    %v247 = vld [vmem:[#allocation9 + $0xcc] sm:$0xff]
    %v248 = vld [vmem:[#allocation9 + $0xd4] sm:$0xf]
    %v249 = vld [vmem:[#allocation9 + $0xd8] sm:$0xff]
    %v250 = vld [vmem:[#allocation9 + $0xe0] sm:$0xf]
    %v251 = vld [vmem:[#allocation9 + $0xe4] sm:$0xff]
    %v252 = vld [vmem:[#allocation9 + $0xec] sm:$0xf]
    %v253 = vld [vmem:[#allocation9 + $0xf0] sm:$0xff]
    %v254 = vld [vmem:[#allocation9 + $0xf8] sm:$0xf]
    %v255 = vld [vmem:[#allocation9 + $0xfc] sm:$0xff]
    %v256 = vld [vmem:[#allocation9 + $0x104] sm:$0xf]
    %v257 = vld [vmem:[#allocation9 + $0x108] sm:$0xff]
    %v258 = vld [vmem:[#allocation9 + $0x110] sm:$0xf]
    %v259 = vld [vmem:[#allocation9 + $0x114] sm:$0xff]
    %v260 = vld [vmem:[#allocation9 + $0x11c] sm:$0xf]
    %v261 = vld [vmem:[#allocation9 + $0x120] sm:$0xff]
    %v262 = vld [vmem:[#allocation9 + $0x128] sm:$0xf]
    %v263 = vld [vmem:[#allocation9 + $0x12c] sm:$0xff]
    %v264 = vld [vmem:[#allocation9 + $0x134] sm:$0xf]
    %v265 = vld [vmem:[#allocation9 + $0x138] sm:$0xff]
    %v266 = vld [vmem:[#allocation9 + $0x140] sm:$0xf]
    %v267 = vld [vmem:[#allocation9 + $0x144] sm:$0xff]
    %v268 = vld [vmem:[#allocation9 + $0x14c] sm:$0xf]
    %v269 = vld [vmem:[#allocation9 + $0x150] sm:$0xff]
    %v270 = vld [vmem:[#allocation9 + $0x158] sm:$0xf]
    %v271 = vld [vmem:[#allocation9 + $0x15c] sm:$0xff]
    %v272 = vld [vmem:[#allocation9 + $0x164] sm:$0xf]
    %v273 = vld [vmem:[#allocation9 + $0x168] sm:$0xff]
    %v274 = vld [vmem:[#allocation9 + $0x170] sm:$0xf]
    %v275 = vld [vmem:[#allocation9 + $0x174] sm:$0xff]
    %v276 = vld [vmem:[#allocation9 + $0x17c] sm:$0xf]
    %v277 = vld [vmem:[#allocation9 + $0x180] sm:$0xff]
    %v278 = vld [vmem:[#allocation9 + $0x188] sm:$0xf]
    %v279 = vld [vmem:[#allocation9 + $0x18c] sm:$0xff]
    %v280 = vld [vmem:[#allocation9 + $0x194] sm:$0xf]
    %v281 = vld [vmem:[#allocation9 + $0x198] sm:$0xff]
    %v282 = vld [vmem:[#allocation9 + $0x1a0] sm:$0xf]
    %v283 = vld [vmem:[#allocation9 + $0x1a4] sm:$0xff]
    %v284 = vld [vmem:[#allocation9 + $0x1ac] sm:$0xf]
    %v285 = vld [vmem:[#allocation9 + $0x1b0] sm:$0xff]
    %v286 = vld [vmem:[#allocation9 + $0x1b8] sm:$0xf]
    %v287 = vld [vmem:[#allocation9 + $0x1bc] sm:$0xff]
    %v288 = vld [vmem:[#allocation9 + $0x1c4] sm:$0xf]
    %v289 = vld [vmem:[#allocation9 + $0x1c8] sm:$0xff]
    %v290 = vld [vmem:[#allocation9 + $0x1d0] sm:$0xf]
    %v291 = vld [vmem:[#allocation9 + $0x1d4] sm:$0xff]
    %v292 = vld [vmem:[#allocation9 + $0x1dc] sm:$0xf]
    %v293 = vld [vmem:[#allocation9 + $0x1e0] sm:$0xff]
    %v294 = vld [vmem:[#allocation9 + $0x1e8] sm:$0xf]
    %v295 = vld [vmem:[#allocation9 + $0x1ec] sm:$0xff]
    %v296 = vld [vmem:[#allocation9 + $0x1f4] sm:$0xf]
    %v297 = vld [vmem:[#allocation9 + $0x1f8] sm:$0xff]
    %v298 = vld [vmem:[#allocation9 + $0x200] sm:$0xf]
    %v299 = vld [vmem:[#allocation9 + $0x204] sm:$0xff]
    %v300 = vld [vmem:[#allocation9 + $0x20c] sm:$0xf]
    %v301 = vld [vmem:[#allocation9 + $0x210] sm:$0xff]
    %v302 = vld [vmem:[#allocation9 + $0x218] sm:$0xf]
    %v303 = vld [vmem:[#allocation9 + $0x21c] sm:$0xff]
    %v304 = vld [vmem:[#allocation9 + $0x224] sm:$0xf]
    %v305 = vld [vmem:[#allocation9 + $0x228] sm:$0xff]
    %v306 = vld [vmem:[#allocation9 + $0x230] sm:$0xf]
    %v307 = vld [vmem:[#allocation9 + $0x234] sm:$0xff]
    %v308 = vld [vmem:[#allocation9 + $0x23c] sm:$0xf]
    %v309 = vld [vmem:[#allocation9 + $0x240] sm:$0xff]
    %v310 = vld [vmem:[#allocation9 + $0x248] sm:$0xf]
    %v311 = vld [vmem:[#allocation9 + $0x24c] sm:$0xff]
    %v312 = vld [vmem:[#allocation9 + $0x254] sm:$0xf]
    %v313 = vld [vmem:[#allocation9 + $0x258] sm:$0xff]
    %v314 = vld [vmem:[#allocation9 + $0x260] sm:$0xf]
    %v315 = vld [vmem:[#allocation9 + $0x264] sm:$0xff]
    %v316 = vld [vmem:[#allocation9 + $0x26c] sm:$0xf]
    %v317 = vld [vmem:[#allocation9 + $0x270] sm:$0xff]
    %v318 = vld [vmem:[#allocation9 + $0x278] sm:$0xf]
    %v319 = vld [vmem:[#allocation9 + $0x27c] sm:$0xff]
    %v320 = vld [vmem:[#allocation9 + $0x284] sm:$0xf]
    %v321 = vld [vmem:[#allocation9 + $0x288] sm:$0xff]
    %v322 = vld [vmem:[#allocation9 + $0x290] sm:$0xf]
    %v323 = vld [vmem:[#allocation9 + $0x294] sm:$0xff]
    %v324 = vld [vmem:[#allocation9 + $0x29c] sm:$0xf]
    %v325 = vld [vmem:[#allocation9 + $0x2a0] sm:$0xff]
    %v326 = vld [vmem:[#allocation9 + $0x2a8] sm:$0xf]
    %v327 = vld [vmem:[#allocation9 + $0x2ac] sm:$0xff]
    %v328 = vld [vmem:[#allocation9 + $0x2b4] sm:$0xf]
    %v329 = vld [vmem:[#allocation9 + $0x2b8] sm:$0xff]
    %v330 = vld [vmem:[#allocation9 + $0x2c0] sm:$0xf]
    %v331 = vld [vmem:[#allocation9 + $0x2c4] sm:$0xff]
    %v332 = vld [vmem:[#allocation9 + $0x2cc] sm:$0xf]
    %v333 = vld [vmem:[#allocation9 + $0x2d0] sm:$0xff]
    %v334 = vld [vmem:[#allocation9 + $0x2d8] sm:$0xf]
    %v335 = vld [vmem:[#allocation9 + $0x2dc] sm:$0xff]
    %v336 = vld [vmem:[#allocation9 + $0x2e4] sm:$0xf]
    %v337 = vld [vmem:[#allocation9 + $0x2e8] sm:$0xff]
    %v338 = vld [vmem:[#allocation9 + $0x2f0] sm:$0xf]
    %v339 = vld [vmem:[#allocation9 + $0x2f4] sm:$0xff]
    %v340 = vld [vmem:[#allocation9 + $0x2fc] sm:$0xf]
    %v341 = vld [vmem:[%s4] sm:$0x7]
    %v343 = vperm.slane %v341, 0
    %v344 = vperm.slane %v341, 1
    %v345 = vperm.slane %v341, 2
    %v477 = vunpack.c.l.b16 %v213
    %v478 = vunpack.c.h.b16 %v213
    %v479 = vunpack.c.l.b16 %v214
    %v480 = vunpack.c.l.b16 %v215
    %v481 = vunpack.c.h.b16 %v215
    %v482 = vunpack.c.l.b16 %v216
    %v483 = vunpack.c.l.b16 %v217
    %v484 = vunpack.c.h.b16 %v217
    %v485 = vunpack.c.l.b16 %v218
    %v486 = vunpack.c.l.b16 %v219
    %v487 = vunpack.c.h.b16 %v219
    %v488 = vunpack.c.l.b16 %v220
    %v489 = vunpack.c.l.b16 %v221
    %v490 = vunpack.c.h.b16 %v221
    %v491 = vunpack.c.l.b16 %v222
    %v492 = vunpack.c.l.b16 %v223
    %v493 = vunpack.c.h.b16 %v223
    %v494 = vunpack.c.l.b16 %v224
    %v495 = vunpack.c.l.b16 %v225
    %v496 = vunpack.c.h.b16 %v225
    %v497 = vunpack.c.l.b16 %v226
    %v498 = vunpack.c.l.b16 %v227
    %v499 = vunpack.c.h.b16 %v227
    %v500 = vunpack.c.l.b16 %v228
    %v501 = vunpack.c.l.b16 %v229
    %v502 = vunpack.c.h.b16 %v229
    %v503 = vunpack.c.l.b16 %v230
    %v504 = vunpack.c.l.b16 %v231
    %v505 = vunpack.c.h.b16 %v231
    %v506 = vunpack.c.l.b16 %v232
    %v507 = vunpack.c.l.b16 %v233
    %v508 = vunpack.c.h.b16 %v233
    %v509 = vunpack.c.l.b16 %v234
    %v510 = vunpack.c.l.b16 %v235
    %v511 = vunpack.c.h.b16 %v235
    %v512 = vunpack.c.l.b16 %v236
    %v513 = vunpack.c.l.b16 %v237
    %v514 = vunpack.c.h.b16 %v237
    %v515 = vunpack.c.l.b16 %v238
    %v516 = vunpack.c.l.b16 %v239
    %v517 = vunpack.c.h.b16 %v239
    %v518 = vunpack.c.l.b16 %v240
    %v519 = vunpack.c.l.b16 %v241
    %v520 = vunpack.c.h.b16 %v241
    %v521 = vunpack.c.l.b16 %v242
    %v522 = vunpack.c.l.b16 %v243
    %v523 = vunpack.c.h.b16 %v243
    %v524 = vunpack.c.l.b16 %v244
    %v525 = vunpack.c.l.b16 %v245
    %v526 = vunpack.c.h.b16 %v245
    %v527 = vunpack.c.l.b16 %v246
    %v528 = vunpack.c.l.b16 %v247
    %v529 = vunpack.c.h.b16 %v247
    %v530 = vunpack.c.l.b16 %v248
    %v531 = vunpack.c.l.b16 %v249
    %v532 = vunpack.c.h.b16 %v249
    %v533 = vunpack.c.l.b16 %v250
    %v534 = vunpack.c.l.b16 %v251
    %v535 = vunpack.c.h.b16 %v251
    %v536 = vunpack.c.l.b16 %v252
    %v537 = vunpack.c.l.b16 %v253
    %v538 = vunpack.c.h.b16 %v253
    %v539 = vunpack.c.l.b16 %v254
    %v540 = vunpack.c.l.b16 %v255
    %v541 = vunpack.c.h.b16 %v255
    %v542 = vunpack.c.l.b16 %v256
    %v543 = vunpack.c.l.b16 %v257
    %v544 = vunpack.c.h.b16 %v257
    %v545 = vunpack.c.l.b16 %v258
    %v546 = vunpack.c.l.b16 %v259
    %v547 = vunpack.c.h.b16 %v259
    %v548 = vunpack.c.l.b16 %v260
    %v549 = vunpack.c.l.b16 %v261
    %v550 = vunpack.c.h.b16 %v261
    %v551 = vunpack.c.l.b16 %v262
    %v552 = vunpack.c.l.b16 %v263
    %v553 = vunpack.c.h.b16 %v263
    %v554 = vunpack.c.l.b16 %v264
    %v555 = vunpack.c.l.b16 %v265
    %v556 = vunpack.c.h.b16 %v265
    %v557 = vunpack.c.l.b16 %v266
    %v558 = vunpack.c.l.b16 %v267
    %v559 = vunpack.c.h.b16 %v267
    %v560 = vunpack.c.l.b16 %v268
    %v561 = vunpack.c.l.b16 %v269
    %v562 = vunpack.c.h.b16 %v269
    %v563 = vunpack.c.l.b16 %v270
    %v564 = vunpack.c.l.b16 %v271
    %v565 = vunpack.c.h.b16 %v271
    %v566 = vunpack.c.l.b16 %v272
    %v567 = vunpack.c.l.b16 %v273
    %v568 = vunpack.c.h.b16 %v273
    %v569 = vunpack.c.l.b16 %v274
    %v570 = vunpack.c.l.b16 %v275
    %v571 = vunpack.c.h.b16 %v275
    %v572 = vunpack.c.l.b16 %v276
    %v573 = vunpack.c.l.b16 %v277
    %v574 = vunpack.c.h.b16 %v277
    %v575 = vunpack.c.l.b16 %v278
    %v576 = vunpack.c.l.b16 %v279
    %v577 = vunpack.c.h.b16 %v279
    %v578 = vunpack.c.l.b16 %v280
    %v579 = vunpack.c.l.b16 %v281
    %v580 = vunpack.c.h.b16 %v281
    %v581 = vunpack.c.l.b16 %v282
    %v582 = vunpack.c.l.b16 %v283
    %v583 = vunpack.c.h.b16 %v283
    %v584 = vunpack.c.l.b16 %v284
    %v585 = vunpack.c.l.b16 %v285
    %v586 = vunpack.c.h.b16 %v285
    %v587 = vunpack.c.l.b16 %v286
    %v588 = vunpack.c.l.b16 %v287
    %v589 = vunpack.c.h.b16 %v287
    %v590 = vunpack.c.l.b16 %v288
    %v591 = vunpack.c.l.b16 %v289
    %v592 = vunpack.c.h.b16 %v289
    %v593 = vunpack.c.l.b16 %v290
    %v594 = vunpack.c.l.b16 %v291
    %v595 = vunpack.c.h.b16 %v291
    %v596 = vunpack.c.l.b16 %v292
    %v597 = vunpack.c.l.b16 %v293
    %v598 = vunpack.c.h.b16 %v293
    %v599 = vunpack.c.l.b16 %v294
    %v600 = vunpack.c.l.b16 %v295
    %v601 = vunpack.c.h.b16 %v295
    %v602 = vunpack.c.l.b16 %v296
    %v603 = vunpack.c.l.b16 %v297
    %v604 = vunpack.c.h.b16 %v297
    %v605 = vunpack.c.l.b16 %v298
    %v606 = vunpack.c.l.b16 %v299
    %v607 = vunpack.c.h.b16 %v299
    %v608 = vunpack.c.l.b16 %v300
    %v609 = vunpack.c.l.b16 %v301
    %v610 = vunpack.c.h.b16 %v301
    %v611 = vunpack.c.l.b16 %v302
    %v612 = vunpack.c.l.b16 %v303
    %v613 = vunpack.c.h.b16 %v303
    %v614 = vunpack.c.l.b16 %v304
    %v615 = vunpack.c.l.b16 %v305
    %v616 = vunpack.c.h.b16 %v305
    %v617 = vunpack.c.l.b16 %v306
    %v618 = vunpack.c.l.b16 %v307
    %v619 = vunpack.c.h.b16 %v307
    %v620 = vunpack.c.l.b16 %v308
    %v621 = vunpack.c.l.b16 %v309
    %v622 = vunpack.c.h.b16 %v309
    %v623 = vunpack.c.l.b16 %v310
    %v624 = vunpack.c.l.b16 %v311
    %v625 = vunpack.c.h.b16 %v311
    %v626 = vunpack.c.l.b16 %v312
    %v627 = vunpack.c.l.b16 %v313
    %v628 = vunpack.c.h.b16 %v313
    %v629 = vunpack.c.l.b16 %v314
    %v630 = vunpack.c.l.b16 %v315
    %v631 = vunpack.c.h.b16 %v315
    %v632 = vunpack.c.l.b16 %v316
    %v633 = vunpack.c.l.b16 %v317
    %v634 = vunpack.c.h.b16 %v317
    %v635 = vunpack.c.l.b16 %v318
    %v636 = vunpack.c.l.b16 %v319
    %v637 = vunpack.c.h.b16 %v319
    %v638 = vunpack.c.l.b16 %v320
    %v639 = vunpack.c.l.b16 %v321
    %v640 = vunpack.c.h.b16 %v321
    %v641 = vunpack.c.l.b16 %v322
    %v642 = vunpack.c.l.b16 %v323
    %v643 = vunpack.c.h.b16 %v323
    %v644 = vunpack.c.l.b16 %v324
    %v645 = vunpack.c.l.b16 %v325
    %v646 = vunpack.c.h.b16 %v325
    %v647 = vunpack.c.l.b16 %v326
    %v648 = vunpack.c.l.b16 %v327
    %v649 = vunpack.c.h.b16 %v327
    %v650 = vunpack.c.l.b16 %v328
    %v651 = vunpack.c.l.b16 %v329
    %v652 = vunpack.c.h.b16 %v329
    %v653 = vunpack.c.l.b16 %v330
    %v654 = vunpack.c.l.b16 %v331
    %v655 = vunpack.c.h.b16 %v331
    %v656 = vunpack.c.l.b16 %v332
    %v657 = vunpack.c.l.b16 %v333
    %v658 = vunpack.c.h.b16 %v333
    %v659 = vunpack.c.l.b16 %v334
    %v660 = vunpack.c.l.b16 %v335
    %v661 = vunpack.c.h.b16 %v335
    %v662 = vunpack.c.l.b16 %v336
    %v663 = vunpack.c.l.b16 %v337
    %v664 = vunpack.c.h.b16 %v337
    %v665 = vunpack.c.l.b16 %v338
    %v666 = vunpack.c.l.b16 %v339
    %v667 = vunpack.c.h.b16 %v339
    %v668 = vunpack.c.l.b16 %v340
    %v669 = vpack.c.b16 %v480, %v477
    %v670 = vpack.c.b16 %v481, %v478
    %v671 = vpack.c.b16 %v482, %v479
    %v672 = vpack.c.b16 %v486, %v483
    %v673 = vpack.c.b16 %v487, %v484
    %v674 = vpack.c.b16 %v488, %v485
    %v675 = vpack.c.b16 %v492, %v489
    %v676 = vpack.c.b16 %v493, %v490
    %v677 = vpack.c.b16 %v494, %v491
    %v678 = vpack.c.b16 %v498, %v495
    %v679 = vpack.c.b16 %v499, %v496
    %v680 = vpack.c.b16 %v500, %v497
    %v681 = vpack.c.b16 %v504, %v501
    %v682 = vpack.c.b16 %v505, %v502
    %v683 = vpack.c.b16 %v506, %v503
    %v684 = vpack.c.b16 %v510, %v507
    %v685 = vpack.c.b16 %v511, %v508
    %v686 = vpack.c.b16 %v512, %v509
    %v687 = vpack.c.b16 %v516, %v513
    %v688 = vpack.c.b16 %v517, %v514
    %v689 = vpack.c.b16 %v518, %v515
    %v690 = vpack.c.b16 %v522, %v519
    %v691 = vpack.c.b16 %v523, %v520
    %v692 = vpack.c.b16 %v524, %v521
    %v693 = vpack.c.b16 %v528, %v525
    %v694 = vpack.c.b16 %v529, %v526
    %v695 = vpack.c.b16 %v530, %v527
    %v696 = vpack.c.b16 %v534, %v531
    %v697 = vpack.c.b16 %v535, %v532
    %v698 = vpack.c.b16 %v536, %v533
    %v699 = vpack.c.b16 %v540, %v537
    %v700 = vpack.c.b16 %v541, %v538
    %v701 = vpack.c.b16 %v542, %v539
    %v702 = vpack.c.b16 %v546, %v543
    %v703 = vpack.c.b16 %v547, %v544
    %v704 = vpack.c.b16 %v548, %v545
    %v705 = vpack.c.b16 %v552, %v549
    %v706 = vpack.c.b16 %v553, %v550
    %v707 = vpack.c.b16 %v554, %v551
    %v708 = vpack.c.b16 %v558, %v555
    %v709 = vpack.c.b16 %v559, %v556
    %v710 = vpack.c.b16 %v560, %v557
    %v711 = vpack.c.b16 %v564, %v561
    %v712 = vpack.c.b16 %v565, %v562
    %v713 = vpack.c.b16 %v566, %v563
    %v714 = vpack.c.b16 %v570, %v567
    %v715 = vpack.c.b16 %v571, %v568
    %v716 = vpack.c.b16 %v572, %v569
    %v717 = vpack.c.b16 %v576, %v573
    %v718 = vpack.c.b16 %v577, %v574
    %v719 = vpack.c.b16 %v578, %v575
    %v720 = vpack.c.b16 %v582, %v579
    %v721 = vpack.c.b16 %v583, %v580
    %v722 = vpack.c.b16 %v584, %v581
    %v723 = vpack.c.b16 %v588, %v585
    %v724 = vpack.c.b16 %v589, %v586
    %v725 = vpack.c.b16 %v590, %v587
    %v726 = vpack.c.b16 %v594, %v591
    %v727 = vpack.c.b16 %v595, %v592
    %v728 = vpack.c.b16 %v596, %v593
    %v729 = vpack.c.b16 %v600, %v597
    %v730 = vpack.c.b16 %v601, %v598
    %v731 = vpack.c.b16 %v602, %v599
    %v732 = vpack.c.b16 %v606, %v603
    %v733 = vpack.c.b16 %v607, %v604
    %v734 = vpack.c.b16 %v608, %v605
    %v735 = vpack.c.b16 %v612, %v609
    %v736 = vpack.c.b16 %v613, %v610
    %v737 = vpack.c.b16 %v614, %v611
    %v738 = vpack.c.b16 %v618, %v615
    %v739 = vpack.c.b16 %v619, %v616
    %v740 = vpack.c.b16 %v620, %v617
    %v741 = vpack.c.b16 %v624, %v621
    %v742 = vpack.c.b16 %v625, %v622
    %v743 = vpack.c.b16 %v626, %v623
    %v744 = vpack.c.b16 %v630, %v627
    %v745 = vpack.c.b16 %v631, %v628
    %v746 = vpack.c.b16 %v632, %v629
    %v747 = vpack.c.b16 %v636, %v633
    %v748 = vpack.c.b16 %v637, %v634
    %v749 = vpack.c.b16 %v638, %v635
    %v750 = vpack.c.b16 %v642, %v639
    %v751 = vpack.c.b16 %v643, %v640
    %v752 = vpack.c.b16 %v644, %v641
    %v753 = vpack.c.b16 %v648, %v645
    %v754 = vpack.c.b16 %v649, %v646
    %v755 = vpack.c.b16 %v650, %v647
    %v756 = vpack.c.b16 %v654, %v651
    %v757 = vpack.c.b16 %v655, %v652
    %v758 = vpack.c.b16 %v656, %v653
    %v759 = vpack.c.b16 %v660, %v657
    %v760 = vpack.c.b16 %v661, %v658
    %v761 = vpack.c.b16 %v662, %v659
    %v762 = vpack.c.b16 %v666, %v663
    %v763 = vpack.c.b16 %v667, %v664
    %v764 = vpack.c.b16 %v668, %v665
    %861 = vmatpush.bf16.msra.mxu0 %v690
    %862 = vmatpush.bf16.msra.mxu0 %v687
    %863 = vmatpush.bf16.msra.mxu0 %v684
    %864 = vmatpush.bf16.msra.mxu0 %v681
    %865 = vmatpush.bf16.msra.mxu0 %v678
    %866 = vmatpush.bf16.msra.mxu0 %v675
    %867 = vmatpush.bf16.msra.mxu0 %v672
    %868 = vmatpush.bf16.msra.mxu0 %v669
    %869 = vmatmul.bf16.gmra.mxu0 %v209
    %v870 = vpop.f32.mrf.mxu0
    %v871 = vadd.f32 %v343, %v870
    %v872 = vpop.f32.mrf.mxu0
    %873 = vdwg.mxu0
    %874 = vmatpush.bf16.msra.mxu0 %v714
    %875 = vmatpush.bf16.msra.mxu0 %v711
    %876 = vmatpush.bf16.msra.mxu0 %v708
    %877 = vmatpush.bf16.msra.mxu0 %v705
    %878 = vmatpush.bf16.msra.mxu0 %v702
    %879 = vmatpush.bf16.msra.mxu0 %v699
    %880 = vmatpush.bf16.msra.mxu0 %v696
    %881 = vmatpush.bf16.msra.mxu0 %v693
    %882 = vmatmul.bf16.gmra.mxu0 %v210
    %v883 = vpop.f32.mrf.mxu0
    %v884 = vadd.f32 %v871, %v883
    %v885 = vpop.f32.mrf.mxu0
    %886 = vdwg.mxu0
    %887 = vmatpush.bf16.msra.mxu0 %v738
    %888 = vmatpush.bf16.msra.mxu0 %v735
    %889 = vmatpush.bf16.msra.mxu0 %v732
    %890 = vmatpush.bf16.msra.mxu0 %v729
    %891 = vmatpush.bf16.msra.mxu0 %v726
    %892 = vmatpush.bf16.msra.mxu0 %v723
    %893 = vmatpush.bf16.msra.mxu0 %v720
    %894 = vmatpush.bf16.msra.mxu0 %v717
    %895 = vmatmul.bf16.gmra.mxu0 %v211
    %v896 = vpop.f32.mrf.mxu0
    %v897 = vadd.f32 %v884, %v896
    %v898 = vpop.f32.mrf.mxu0
    %899 = vdwg.mxu0
    %900 = vmatpush.bf16.msra.mxu0 %v762
    %901 = vmatpush.bf16.msra.mxu0 %v759
    %902 = vmatpush.bf16.msra.mxu0 %v756
    %903 = vmatpush.bf16.msra.mxu0 %v753
    %904 = vmatpush.bf16.msra.mxu0 %v750
    %905 = vmatpush.bf16.msra.mxu0 %v747
    %906 = vmatpush.bf16.msra.mxu0 %v744
    %907 = vmatpush.bf16.msra.mxu0 %v741
    %908 = vmatmul.bf16.gmra.mxu0 %v212
    %v909 = vpop.f32.mrf.mxu0
    %v910 = vadd.f32 %v897, %v909
    %v911 = vpop.f32.mrf.mxu0
    %912 = vdwg.mxu0
    %913 = vmatpush.bf16.msra.mxu0 %v691
    %914 = vmatpush.bf16.msra.mxu0 %v688
    %915 = vmatpush.bf16.msra.mxu0 %v685
    %916 = vmatpush.bf16.msra.mxu0 %v682
    %917 = vmatpush.bf16.msra.mxu0 %v679
    %918 = vmatpush.bf16.msra.mxu0 %v676
    %919 = vmatpush.bf16.msra.mxu0 %v673
    %920 = vmatpush.bf16.msra.mxu0 %v670
    %921 = vmatmul.bf16.gmra.mxu0 %v209
    %v922 = vpop.f32.mrf.mxu0
    %v923 = vadd.f32 %v344, %v922
    %v924 = vpop.f32.mrf.mxu0
    %925 = vdwg.mxu0
    %926 = vmatpush.bf16.msra.mxu0 %v715
    %927 = vmatpush.bf16.msra.mxu0 %v712
    %928 = vmatpush.bf16.msra.mxu0 %v709
    %929 = vmatpush.bf16.msra.mxu0 %v706
    %930 = vmatpush.bf16.msra.mxu0 %v703
    %931 = vmatpush.bf16.msra.mxu0 %v700
    %932 = vmatpush.bf16.msra.mxu0 %v697
    %933 = vmatpush.bf16.msra.mxu0 %v694
    %934 = vmatmul.bf16.gmra.mxu0 %v210
    %v935 = vpop.f32.mrf.mxu0
    %v936 = vadd.f32 %v923, %v935
    %v937 = vpop.f32.mrf.mxu0
    %938 = vdwg.mxu0
    %939 = vmatpush.bf16.msra.mxu0 %v739
    %940 = vmatpush.bf16.msra.mxu0 %v736
    %941 = vmatpush.bf16.msra.mxu0 %v733
    %942 = vmatpush.bf16.msra.mxu0 %v730
    %943 = vmatpush.bf16.msra.mxu0 %v727
    %944 = vmatpush.bf16.msra.mxu0 %v724
    %945 = vmatpush.bf16.msra.mxu0 %v721
    %946 = vmatpush.bf16.msra.mxu0 %v718
    %947 = vmatmul.bf16.gmra.mxu0 %v211
    %v948 = vpop.f32.mrf.mxu0
    %v949 = vadd.f32 %v936, %v948
    %v950 = vpop.f32.mrf.mxu0
    %951 = vdwg.mxu0
    %952 = vmatpush.bf16.msra.mxu0 %v763
    %953 = vmatpush.bf16.msra.mxu0 %v760
    %954 = vmatpush.bf16.msra.mxu0 %v757
    %955 = vmatpush.bf16.msra.mxu0 %v754
    %956 = vmatpush.bf16.msra.mxu0 %v751
    %957 = vmatpush.bf16.msra.mxu0 %v748
    %958 = vmatpush.bf16.msra.mxu0 %v745
    %959 = vmatpush.bf16.msra.mxu0 %v742
    %960 = vmatmul.bf16.gmra.mxu0 %v212
    %v961 = vpop.f32.mrf.mxu0
    %v962 = vadd.f32 %v949, %v961
    %v963 = vpop.f32.mrf.mxu0
    %964 = vdwg.mxu0
    %965 = vmatpush.bf16.msra.mxu0 %v692
    %966 = vmatpush.bf16.msra.mxu0 %v689
    %967 = vmatpush.bf16.msra.mxu0 %v686
    %968 = vmatpush.bf16.msra.mxu0 %v683
    %969 = vmatpush.bf16.msra.mxu0 %v680
    %970 = vmatpush.bf16.msra.mxu0 %v677
    %971 = vmatpush.bf16.msra.mxu0 %v674
    %972 = vmatpush.bf16.msra.mxu0 %v671
    %973 = vmatmul.bf16.gmra.mxu0 %v209
    %v974 = vpop.f32.mrf.mxu0
    %v975 = vadd.f32 %v345, %v974
    %v976 = vpop.f32.mrf.mxu0
    %977 = vdwg.mxu0
    %978 = vmatpush.bf16.msra.mxu0 %v716
    %979 = vmatpush.bf16.msra.mxu0 %v713
    %980 = vmatpush.bf16.msra.mxu0 %v710
    %981 = vmatpush.bf16.msra.mxu0 %v707
    %982 = vmatpush.bf16.msra.mxu0 %v704
    %983 = vmatpush.bf16.msra.mxu0 %v701
    %984 = vmatpush.bf16.msra.mxu0 %v698
    %985 = vmatpush.bf16.msra.mxu0 %v695
    %986 = vmatmul.bf16.gmra.mxu0 %v210
    %v987 = vpop.f32.mrf.mxu0
    %v988 = vadd.f32 %v975, %v987
    %v989 = vpop.f32.mrf.mxu0
    %990 = vdwg.mxu0
    %991 = vmatpush.bf16.msra.mxu0 %v740
    %992 = vmatpush.bf16.msra.mxu0 %v737
    %993 = vmatpush.bf16.msra.mxu0 %v734
    %994 = vmatpush.bf16.msra.mxu0 %v731
    %995 = vmatpush.bf16.msra.mxu0 %v728
    %996 = vmatpush.bf16.msra.mxu0 %v725
    %997 = vmatpush.bf16.msra.mxu0 %v722
    %998 = vmatpush.bf16.msra.mxu0 %v719
    %999 = vmatmul.bf16.gmra.mxu0 %v211
    %v1000 = vpop.f32.mrf.mxu0
    %v1001 = vadd.f32 %v988, %v1000
    %v1002 = vpop.f32.mrf.mxu0
    %1003 = vdwg.mxu0
    %1004 = vmatpush.bf16.msra.mxu0 %v764
    %1005 = vmatpush.bf16.msra.mxu0 %v761
    %1006 = vmatpush.bf16.msra.mxu0 %v758
    %1007 = vmatpush.bf16.msra.mxu0 %v755
    %1008 = vmatpush.bf16.msra.mxu0 %v752
    %1009 = vmatpush.bf16.msra.mxu0 %v749
    %1010 = vmatpush.bf16.msra.mxu0 %v746
    %1011 = vmatpush.bf16.msra.mxu0 %v743
    %1012 = vmatmul.bf16.gmra.mxu0 %v212
    %v1013 = vpop.f32.mrf.mxu0
    %v1014 = vadd.f32 %v1001, %v1013
    %v1015 = vpop.f32.mrf.mxu0
    %1016 = vdwg.mxu0
    %v1017 = vmax.f32 %v910, 0.0
    %v1018 = vmax.f32 %v962, 0.0
    %v1019 = vmax.f32 %v1014, 0.0
    %v1020 = vld [vmem:[%s5] sm:$0x7]
    %v1022 = vperm.slane %v1020, 0
    %v1023 = vperm.slane %v1020, 1
    %v1024 = vperm.slane %v1020, 2
    %v1028 = vmul.f32 %v1017, %v1022
    %v1029 = vmul.f32 %v1018, %v1023
    %v1030 = vmul.f32 %v1019, %v1024
    %v1031 = vsel %vm140, %v1028, 0.0
    %v1032 = vsel %vm140, %v1029, 0.0
    %v1033 = vadd.f32 %v1031, %v1032
    %v1034 = vsel %vm140, %v1030, 0.0
    %v1035 = vadd.f32 %v1033, %v1034
    %1036 = vadd.xlane.f32.xlu0 %v1035
    %v1037 = vpop.xlane.xlu0 %1036
    %v1038 = vld [vmem:[#allocation2] sm:$0x1]
    %1040 = vset.pattern.permute.xlu0 0
    %1041 = vperm.xlu0 %1040, %v1038
    %v1042 = vpop.permute.xlu0 %1041
    %v1044 = vperm.slane %v1042, 0
    %v1045 = vadd.f32 %v1037, %v1044
    %v1047 = vlaneseq
    %v1048 = vand.u32 %v1047, 127
    %v1049 = vperm.slane %v1045, %v1048
    %vm1051 = vcmask 8192
    %1052 = vst.msk [vmem:[#allocation11] sm:$0x1] %vm1051, %v1049
    // Predicated region
    $region46: #{tpu_custom_call.1} parent=1 // pred_check
      _
    $region47: #{tpu_custom_call.1} parent=1 // pred_check_branch
      %1054 = sbr.rel (0) target = $region49
    $region48: #{tpu_custom_call.1} parent=1 // pred_region
      %1056 = vsyncadd [#allocation5], 0
      %s1058 = sshll.u32 [#allocation11], 4
      %s1059 = int_to_ptr.vmem [resolvable:$true] %s1058
      %s1060 = sshll.u32 %s7, 4
      %s1061 = int_to_ptr.hbm [resolvable:$true] %s1060
      %1063 = dma.vmem_to_hbm [thread:$0]  %s1059, 16, %s1061, [#allocation5]
    $region49: #{tpu_custom_call.1} parent=1 // pred_fallthru
      _
    // Predicated region
    $region50: #{tpu_custom_call.1} parent=1 // pred_check
      _
    $region51: #{tpu_custom_call.1} parent=1 // pred_check_branch
      %1065 = sbr.rel (0) target = $region53
    $region52: #{tpu_custom_call.1} parent=1 // pred_region
      %1067 = dma.done [#allocation5], 16
    $region53: #{tpu_custom_call.1} parent=1 // pred_fallthru
      _
    %1068 = vsyncpa [#allocation4], 1
    %1069 = vsyncpa [#allocation7], 1
    %1070 = vsyncpa [#allocation10], 1
    %1071 = vsyncpa [#allocation5], 1

</llo_original>
